<compile_context>
chip_gen: v7x
topology: tpu7x:2x2x1
jax: 0.10.0
libtpu: 0.0.40
codegen_flags: <defaults>
</compile_context>

<pallas_src>
from typing import Dict

import jax
import jax.numpy as jnp
from jax.experimental import pallas as pl
from jax.experimental.pallas import tpu as pltpu


# ----------------------------------------------------------------------------
# Pallas kernel: fused 3-layer MLP
#   out = relu(relu(x @ W1 + b1) @ W2 + b2) @ W3 + b3
# Branch fusion (twin critic / actor+critic) is encoded purely in how the
# weights are packed (block-structured W1, block-diagonal W2/W3), so one
# kernel body serves every mode.
# ----------------------------------------------------------------------------
def _mlp3_kernel(x_ref, w1_ref, b1_ref, w2_ref, b2_ref, w3_ref, b3_ref, o_ref):
    x = x_ref[...]
    h1 = jnp.dot(x, w1_ref[...], preferred_element_type=jnp.float32) + b1_ref[...]
    h1 = jnp.maximum(h1, 0.0)                                   # ReLU (VPU)
    h2 = jnp.dot(h1, w2_ref[...], preferred_element_type=jnp.float32) + b2_ref[...]
    h2 = jnp.maximum(h2, 0.0)                                   # ReLU (VPU)
    out = jnp.dot(h2, w3_ref[...], preferred_element_type=jnp.float32) + b3_ref[...]
    o_ref[...] = out.astype(o_ref.dtype)


def fused_mlp3(x: jnp.ndarray, packed, *, batch_tile: int = 512) -> jnp.ndarray:
    """One pallas_call for a (possibly multi-branch, block-packed) 3-layer MLP.

    Batch-tiled grid; weight/bias BlockSpecs use a constant index_map so the
    parameters stay resident in VMEM across all batch tiles (no re-DMA).
    """
    w1, b1, w2, b2, w3, b3 = packed
    B, K = x.shape
    H1 = w1.shape[1]
    H2 = w2.shape[1]
    A = w3.shape[1]

    # Batch tile: whole batch if small, otherwise sublane-aligned tiles.
    if B <= batch_tile:
        tb = B
    else:
        tb = max(8, (batch_tile // 8) * 8)
    grid = (pl.cdiv(B, tb),)

    def _x_map(i):
        return (i, 0)

    def _const_map(i):
        return (0, 0)

    in_specs = [
        pl.BlockSpec((tb, K), _x_map),
        pl.BlockSpec(w1.shape, _const_map),
        pl.BlockSpec(b1.shape, _const_map),
        pl.BlockSpec(w2.shape, _const_map),
        pl.BlockSpec(b2.shape, _const_map),
        pl.BlockSpec(w3.shape, _const_map),
        pl.BlockSpec(b3.shape, _const_map),
    ]
    out_specs = pl.BlockSpec((tb, A), _x_map)

    flops = 2 * B * (K * H1 + H1 * H2 + H2 * A)
    bytes_accessed = 4 * (
        B * K + B * A + K * H1 + H1 + H1 * H2 + H2 + H2 * A + A
    )
    cost = pl.CostEstimate(
        flops=flops, transcendentals=0, bytes_accessed=bytes_accessed
    )

    return pl.pallas_call(
        _mlp3_kernel,
        out_shape=jax.ShapeDtypeStruct((B, A), jnp.float32),
        grid=grid,
        in_specs=in_specs,
        out_specs=out_specs,
        compiler_params=pltpu.CompilerParams(
            # batch tiles are independent -> shard across TensorCores on v7x
            dimension_semantics=("parallel",),
        ),
        cost_estimate=cost,
    )(x, w1, b1, w2, b2, w3, b3)


# ----------------------------------------------------------------------------
# Parameter construction & branch packing
# ----------------------------------------------------------------------------
def _make_mlp3_params(key, in_dim: int, hidden: int, out_dim: int):
    k1, k2, k3, k4, k5, k6 = jax.random.split(key, 6)
    scale1 = 1.0 / jnp.sqrt(in_dim)
    scale2 = 1.0 / jnp.sqrt(hidden)
    return {
        # weights stored (in, out) so the kernel does x @ W (PyTorch stores (out, in))
        "w1": jax.random.uniform(k1, (in_dim, hidden), jnp.float32, -scale1, scale1),
        "b1": jax.random.uniform(k2, (1, hidden), jnp.float32, -scale1, scale1),
        "w2": jax.random.uniform(k3, (hidden, hidden), jnp.float32, -scale2, scale2),
        "b2": jax.random.uniform(k4, (1, hidden), jnp.float32, -scale2, scale2),
        "w3": jax.random.uniform(k5, (hidden, out_dim), jnp.float32, -scale2, scale2),
        "b3": jax.random.uniform(k6, (1, out_dim), jnp.float32, -scale2, scale2),
    }


def _block_diag(mats):
    rows = sum(m.shape[0] for m in mats)
    cols = sum(m.shape[1] for m in mats)
    out = jnp.zeros((rows, cols), mats[0].dtype)
    r = c = 0
    for m in mats:
        out = out.at[r:r + m.shape[0], c:c + m.shape[1]].set(m)
        r += m.shape[0]
        c += m.shape[1]
    return out


def _pack_branch_groups(groups):
    """Pack several independent 3-layer MLP branches into ONE weight stack.

    `groups` is a list of lists of per-branch param dicts.  Branches within a
    group read the same row-block of the (concatenated) input; groups consume
    consecutive feature slices of the concatenated input.  Layer-1 becomes a
    block-structured matrix, layers 2/3 block-diagonal, so a single 3-matmul
    chain evaluates every branch exactly (zero blocks contribute exact zeros).
    Built once at init time.
    """
    flat = [p for g in groups for p in g]
    k_tot = sum(g[0]["w1"].shape[0] for g in groups)
    h_tot = sum(p["w1"].shape[1] for p in flat)

    w1 = jnp.zeros((k_tot, h_tot), jnp.float32)
    row = col = 0
    for g in groups:
        k = g[0]["w1"].shape[0]
        for p in g:
            h = p["w1"].shape[1]
            w1 = w1.at[row:row + k, col:col + h].set(p["w1"])
            col += h
        row += k

    b1 = jnp.concatenate([p["b1"] for p in flat], axis=1)
    w2 = _block_diag([p["w2"] for p in flat])
    b2 = jnp.concatenate([p["b2"] for p in flat], axis=1)
    w3 = _block_diag([p["w3"] for p in flat])
    b3 = jnp.concatenate([p["b3"] for p in flat], axis=1)
    return (w1, b1, w2, b2, w3, b3)


# ----------------------------------------------------------------------------
# MAQAC model (JAX/Pallas port of the ding forward pass)
# ----------------------------------------------------------------------------
class MAQACPallas:
    mode = ["compute_actor", "compute_critic"]

    def __init__(
        self,
        agent_obs_shape: int,
        global_obs_shape: int,
        action_shape: int,
        twin_critic: bool = False,
        actor_head_hidden_size: int = 64,
        actor_head_layer_num: int = 1,
        critic_head_hidden_size: int = 64,
        critic_head_layer_num: int = 1,
        key=None,
    ):
        # TODO(synk): only layer_num=1 (ding's default) is implemented; larger
        # layer_num would just add more fused Linear+ReLU blocks to the chain.
        assert actor_head_layer_num == 1 and critic_head_layer_num == 1, \
            "only layer_num=1 (default) is implemented"
        if key is None:
            key = jax.random.PRNGKey(0)
        ka, kc1, kc2 = jax.random.split(key, 3)
        self.twin_critic = twin_critic
        self.action_shape = action_shape

        self.actor_params = _make_mlp3_params(
            ka, agent_obs_shape, actor_head_hidden_size, action_shape
        )
        if twin_critic:
            self.critic_params = [
                _make_mlp3_params(kc1, global_obs_shape, critic_head_hidden_size, action_shape),
                _make_mlp3_params(kc2, global_obs_shape, critic_head_hidden_size, action_shape),
            ]
            critic_group = self.critic_params
        else:
            self.critic_params = _make_mlp3_params(
                kc1, global_obs_shape, critic_head_hidden_size, action_shape
            )
            critic_group = [self.critic_params]

        # Pre-packed fused weight stacks (built once, reused every call).
        self._actor_packed = _pack_branch_groups([[self.actor_params]])
        # twin critics -> one stack: hidden = 2*H (= 128 lanes, lane-dense), ONE launch
        self._critic_packed = _pack_branch_groups([critic_group])
        # actor + critic(s) -> whole forward in ONE launch
        self._all_packed = _pack_branch_groups([[self.actor_params], critic_group])

    def forward(self, inputs, mode: str) -> Dict:
        assert mode in self.mode, f"not support forward mode: {mode}/{self.mode}"
        return getattr(self, mode)(inputs)

    def compute_actor(self, inputs: Dict) -> Dict:
        action_mask = inputs["obs"]["action_mask"]
        logit = fused_mlp3(inputs["obs"]["agent_state"], self._actor_packed)
        return {"logit": logit, "action_mask": action_mask}

    def compute_critic(self, inputs: Dict) -> Dict:
        gs = inputs["obs"]["global_state"]
        out = fused_mlp3(gs, self._critic_packed)   # both twin critics, single launch
        if self.twin_critic:
            A = self.action_shape
            return {"q_value": [out[:, :A], out[:, A:2 * A]]}
        return {"q_value": out}

    def compute_actor_critic(self, inputs: Dict) -> Dict:
        """Fully-fused path: actor + critic(s) evaluated in a SINGLE pallas_call."""
        obs = inputs["obs"]
        x_cat = jnp.concatenate([obs["agent_state"], obs["global_state"]], axis=1)
        out = fused_mlp3(x_cat, self._all_packed)
        A = self.action_shape
        logit = out[:, :A]
        if self.twin_critic:
            q = [out[:, A:2 * A], out[:, 2 * A:3 * A]]
        else:
            q = out[:, A:2 * A]
        return {"logit": logit, "action_mask": obs["action_mask"], "q_value": q}


# ----------------------------------------------------------------------------
# Pure-JAX reference for correctness checking
# ----------------------------------------------------------------------------
def _mlp3_ref(x, p):
    h1 = jnp.maximum(x @ p["w1"] + p["b1"], 0.0)
    h2 = jnp.maximum(h1 @ p["w2"] + p["b2"], 0.0)
    return h2 @ p["w3"] + p["b3"]


if __name__ == "__main__":
    B = 8                  # batch size
    AGENT_OBS = 10         # agent_obs_shape
    GLOBAL_OBS = 20        # global_obs_shape
    ACTION = 6             # action_shape
    HIDDEN = 64            # actor/critic head hidden size

    key = jax.random.PRNGKey(0)
    k_agent, k_global, k_model = jax.random.split(key, 3)

    agent_state = jax.random.normal(k_agent, (B, AGENT_OBS), jnp.float32)
    global_state = jax.random.normal(k_global, (B, GLOBAL_OBS), jnp.float32)
    action_mask = jnp.ones((B, ACTION), jnp.float32)

    model = MAQACPallas(
        agent_obs_shape=AGENT_OBS,
        global_obs_shape=GLOBAL_OBS,
        action_shape=ACTION,
        twin_critic=True,
        actor_head_hidden_size=HIDDEN,
        critic_head_hidden_size=HIDDEN,
        key=k_model,
    )

    inputs = {
        "obs": {
            "agent_state": agent_state,
            "global_state": global_state,
            "action_mask": action_mask,
        }
    }

    actor_out = model.forward(inputs, "compute_actor")      # 1 launch
    critic_out = model.forward(inputs, "compute_critic")    # 1 launch (twin fused)
    fused_out = model.compute_actor_critic(inputs)          # 1 launch (everything)

    jax.block_until_ready(actor_out["logit"])
    jax.block_until_ready(critic_out["q_value"])
    jax.block_until_ready(fused_out["q_value"])

    # correctness check against pure-JAX reference
    ref_logit = _mlp3_ref(agent_state, model.actor_params)
    ref_q0 = _mlp3_ref(global_state, model.critic_params[0])
    ref_q1 = _mlp3_ref(global_state, model.critic_params[1])

    assert actor_out["logit"].shape == (B, ACTION)
    assert actor_out["action_mask"].shape == (B, ACTION)
    assert isinstance(critic_out["q_value"], list) and len(critic_out["q_value"]) == 2
    assert critic_out["q_value"][0].shape == (B, ACTION)

    tol = dict(atol=5e-5, rtol=5e-5)
    assert jnp.allclose(actor_out["logit"], ref_logit, **tol)
    assert jnp.allclose(critic_out["q_value"][0], ref_q0, **tol)
    assert jnp.allclose(critic_out["q_value"][1], ref_q1, **tol)
    assert jnp.allclose(fused_out["logit"], ref_logit, **tol)
    assert jnp.allclose(fused_out["q_value"][0], ref_q0, **tol)
    assert jnp.allclose(fused_out["q_value"][1], ref_q1, **tol)

    print("KERNEL_OK")
</pallas_src>

<mosaic_0001>
module attributes {stable_mosaic.version = 11 : i64} {
  func.func @_mlp3_kernel(%arg0: i32, %arg1: memref<8x10xf32, #tpu.memory_space<vmem>>, %arg2: memref<10x64xf32, #tpu.memory_space<vmem>>, %arg3: memref<1x64xf32, #tpu.memory_space<vmem>>, %arg4: memref<64x64xf32, #tpu.memory_space<vmem>>, %arg5: memref<1x64xf32, #tpu.memory_space<vmem>>, %arg6: memref<64x6xf32, #tpu.memory_space<vmem>>, %arg7: memref<1x6xf32, #tpu.memory_space<vmem>>, %arg8: memref<8x6xf32, #tpu.memory_space<vmem>>) attributes {dimension_semantics = [#tpu.dimension_semantics<parallel>], iteration_bounds = array<i64: 1>, scalar_prefetch = 0 : i64, scratch_operands = 0 : i64, tpu.core_type = #tpu.core_type<tc>, window_params = [{transform_indices = @transform_0, window_bounds = array<i64: 8, 10>}, {pipeline_mode = #tpu.pipeline_mode<synchronous>, transform_indices = @transform_1, window_bounds = array<i64: 10, 64>}, {pipeline_mode = #tpu.pipeline_mode<synchronous>, transform_indices = @transform_2, window_bounds = array<i64: 1, 64>}, {pipeline_mode = #tpu.pipeline_mode<synchronous>, transform_indices = @transform_3, window_bounds = array<i64: 64, 64>}, {pipeline_mode = #tpu.pipeline_mode<synchronous>, transform_indices = @transform_4, window_bounds = array<i64: 1, 64>}, {pipeline_mode = #tpu.pipeline_mode<synchronous>, transform_indices = @transform_5, window_bounds = array<i64: 64, 6>}, {pipeline_mode = #tpu.pipeline_mode<synchronous>, transform_indices = @transform_6, window_bounds = array<i64: 1, 6>}, {transform_indices = @transform_7, window_bounds = array<i64: 8, 6>}]} {
    %c0 = arith.constant 0 : index
    %c0_0 = arith.constant 0 : index
    %0 = vector.load %arg1[%c0, %c0_0] : memref<8x10xf32, #tpu.memory_space<vmem>>, vector<8x10xf32>
    %c0_1 = arith.constant 0 : index
    %c0_2 = arith.constant 0 : index
    %1 = vector.load %arg2[%c0_1, %c0_2] : memref<10x64xf32, #tpu.memory_space<vmem>>, vector<10x64xf32>
    %cst = arith.constant dense<0.000000e+00> : vector<8x64xf32>
    %2 = tpu.matmul %0, %1, %cst {dimension_numbers = #tpu.dot_dimension_numbers<[1], [0], [0], [1], [0, 0, 1, 1], [], []>} : vector<8x10xf32>, vector<10x64xf32>, vector<8x64xf32> -> vector<8x64xf32>
    %c0_3 = arith.constant 0 : index
    %c0_4 = arith.constant 0 : index
    %3 = vector.load %arg3[%c0_3, %c0_4] : memref<1x64xf32, #tpu.memory_space<vmem>>, vector<1x64xf32>
    %4 = vector.broadcast %3 : vector<1x64xf32> to vector<8x64xf32>
    %5 = arith.addf %2, %4 : vector<8x64xf32>
    %cst_5 = arith.constant 0.000000e+00 : f32
    %6 = vector.broadcast %cst_5 : f32 to vector<8x64xf32>
    %7 = arith.maximumf %5, %6 : vector<8x64xf32>
    %c0_6 = arith.constant 0 : index
    %c0_7 = arith.constant 0 : index
    %8 = vector.load %arg4[%c0_6, %c0_7] : memref<64x64xf32, #tpu.memory_space<vmem>>, vector<64x64xf32>
    %cst_8 = arith.constant dense<0.000000e+00> : vector<8x64xf32>
    %9 = tpu.matmul %7, %8, %cst_8 {dimension_numbers = #tpu.dot_dimension_numbers<[1], [0], [0], [1], [0, 0, 1, 1], [], []>} : vector<8x64xf32>, vector<64x64xf32>, vector<8x64xf32> -> vector<8x64xf32>
    %c0_9 = arith.constant 0 : index
    %c0_10 = arith.constant 0 : index
    %10 = vector.load %arg5[%c0_9, %c0_10] : memref<1x64xf32, #tpu.memory_space<vmem>>, vector<1x64xf32>
    %11 = vector.broadcast %10 : vector<1x64xf32> to vector<8x64xf32>
    %12 = arith.addf %9, %11 : vector<8x64xf32>
    %cst_11 = arith.constant 0.000000e+00 : f32
    %13 = vector.broadcast %cst_11 : f32 to vector<8x64xf32>
    %14 = arith.maximumf %12, %13 : vector<8x64xf32>
    %c0_12 = arith.constant 0 : index
    %c0_13 = arith.constant 0 : index
    %15 = vector.load %arg6[%c0_12, %c0_13] : memref<64x6xf32, #tpu.memory_space<vmem>>, vector<64x6xf32>
    %cst_14 = arith.constant dense<0.000000e+00> : vector<8x6xf32>
    %16 = tpu.matmul %14, %15, %cst_14 {dimension_numbers = #tpu.dot_dimension_numbers<[1], [0], [0], [1], [0, 0, 1, 1], [], []>} : vector<8x64xf32>, vector<64x6xf32>, vector<8x6xf32> -> vector<8x6xf32>
    %c0_15 = arith.constant 0 : index
    %c0_16 = arith.constant 0 : index
    %17 = vector.load %arg7[%c0_15, %c0_16] : memref<1x6xf32, #tpu.memory_space<vmem>>, vector<1x6xf32>
    %18 = vector.broadcast %17 : vector<1x6xf32> to vector<8x6xf32>
    %19 = arith.addf %16, %18 : vector<8x6xf32>
    %c0_17 = arith.constant 0 : index
    %c0_18 = arith.constant 0 : index
    %20 = vector.load %arg8[%c0_17, %c0_18] : memref<8x6xf32, #tpu.memory_space<vmem>>, vector<8x6xf32>
    tpu.vector_store %arg8[%c0_17, %c0_18], %19 {strides = array<i32>} : memref<8x6xf32, #tpu.memory_space<vmem>>, vector<8x6xf32>,
    return
  }
  func.func @transform_0(%arg0: i32) -> (i32, i32) {
    %c0_i32 = arith.constant 0 : i32
    %c0_i32_0 = arith.constant 0 : i32
    return %arg0, %c0_i32 : i32, i32
  }
  func.func @transform_1(%arg0: i32) -> (i32, i32) {
    %c0_i32 = arith.constant 0 : i32
    %c0_i32_0 = arith.constant 0 : i32
    %c0_i32_1 = arith.constant 0 : i32
    return %c0_i32, %c0_i32_0 : i32, i32
  }
  func.func @transform_2(%arg0: i32) -> (i32, i32) {
    %c0_i32 = arith.constant 0 : i32
    %c0_i32_0 = arith.constant 0 : i32
    %c0_i32_1 = arith.constant 0 : i32
    return %c0_i32, %c0_i32_0 : i32, i32
  }
  func.func @transform_3(%arg0: i32) -> (i32, i32) {
    %c0_i32 = arith.constant 0 : i32
    %c0_i32_0 = arith.constant 0 : i32
    %c0_i32_1 = arith.constant 0 : i32
    return %c0_i32, %c0_i32_0 : i32, i32
  }
  func.func @transform_4(%arg0: i32) -> (i32, i32) {
    %c0_i32 = arith.constant 0 : i32
    %c0_i32_0 = arith.constant 0 : i32
    %c0_i32_1 = arith.constant 0 : i32
    return %c0_i32, %c0_i32_0 : i32, i32
  }
  func.func @transform_5(%arg0: i32) -> (i32, i32) {
    %c0_i32 = arith.constant 0 : i32
    %c0_i32_0 = arith.constant 0 : i32
    %c0_i32_1 = arith.constant 0 : i32
    return %c0_i32, %c0_i32_0 : i32, i32
  }
  func.func @transform_6(%arg0: i32) -> (i32, i32) {
    %c0_i32 = arith.constant 0 : i32
    %c0_i32_0 = arith.constant 0 : i32
    %c0_i32_1 = arith.constant 0 : i32
    return %c0_i32, %c0_i32_0 : i32, i32
  }
  func.func @transform_7(%arg0: i32) -> (i32, i32) {
    %c0_i32 = arith.constant 0 : i32
    %c0_i32_0 = arith.constant 0 : i32
    return %arg0, %c0_i32 : i32, i32
  }
}

</mosaic_0001>

<llo_original>
// kernel: tpu_custom_call.1
$region0: #{tpu_custom_call.1}
  #allocation0 [shape = 'u32[]', space=smem, size = 0x4, offset = 0x4, fixed_abs, tag = 'smem constant byte address 0x4 - core index']
  #allocation1 [shape = 'u32[144,128]{1,0:T(1,128)}', space=vmem, size = 0x12000, scoped, tag = 'internal scratch']
  %s0 = inlined_call_operand.hbm [shape: f32[8,10], index: 0, kind: input, shape index: {}]
  %s1 = inlined_call_operand.vmem [shape: f32[10,64], index: 1, kind: input, shape index: {}]
  %s2 = inlined_call_operand.vmem [shape: f32[1,64], index: 2, kind: input, shape index: {}]
  %s3 = inlined_call_operand.vmem [shape: f32[64,64], index: 3, kind: input, shape index: {}]
  %s4 = inlined_call_operand.vmem [shape: f32[1,64], index: 4, kind: input, shape index: {}]
  %s5 = inlined_call_operand.vmem [shape: f32[64,6], index: 5, kind: input, shape index: {}]
  %s6 = inlined_call_operand.vmem [shape: f32[1,6], index: 6, kind: input, shape index: {}]
  %s7 = inlined_call_operand.hbm [shape: f32[8,6], index: 7, kind: output, shape index: {}]
  %s8 = sld [smem:[#allocation0]]
  $region42: #{tpu_custom_call.1} parent=0
    _
  %s10 = ssub.s32 1, %s8
  %s11 = scalar_select 0, %s10, %s8
  $region1: #{tpu_custom_call.1} parent=0
    #allocation2 [shape = 'u8[4096]{0}', space=vmem, size = 0x1000, scoped, tag = 'input window, operand 0, single buffered']
    #allocation3 [shape = 's32[1]{0}', space=sflag, size = 0x4, scoped, tag = 'scoped memory for tpu_custom_call.1']
    #allocation4 [shape = 's32[1]{0}', space=sflag, size = 0x4, scoped, tag = 'scoped memory for tpu_custom_call.1']
    #allocation5 [shape = 'u8[4096]{0}', space=vmem, size = 0x1000, scoped, tag = 'output window, operand 0, single buffered']
    %12 = vsyncpa [#allocation3], 0
    %13 = vsyncpa [#allocation4], 0
    // Predicated region
    $region2: #{tpu_custom_call.1} parent=1 // pred_check
      _
    $region3: #{tpu_custom_call.1} parent=1 // pred_check_branch
      %15 = sbr.rel (0) target = $region5
    $region4: #{tpu_custom_call.1} parent=1 // pred_region
      %s17 = ssub.s32 128, 128
      %18 = vsyncadd [#allocation3], %s17
      %s20 = sshll.u32 [#allocation2], 4
      %s21 = int_to_ptr.vmem [resolvable:$true] %s20
      %23 = dma.hbm_to_vmem [thread:$0]  %s0, 128, %s21, [#allocation3]
    $region5: #{tpu_custom_call.1} parent=1 // pred_fallthru
      _
    // Predicated region
    $region6: #{tpu_custom_call.1} parent=1 // pred_check
      _
    $region7: #{tpu_custom_call.1} parent=1 // pred_check_branch
      %25 = sbr.rel (0) target = $region9
    $region8: #{tpu_custom_call.1} parent=1 // pred_region
      _
    $region9: #{tpu_custom_call.1} parent=1 // pred_fallthru
      _
    // Predicated region
    $region10: #{tpu_custom_call.1} parent=1 // pred_check
      _
    $region11: #{tpu_custom_call.1} parent=1 // pred_check_branch
      %27 = sbr.rel (0) target = $region13
    $region12: #{tpu_custom_call.1} parent=1 // pred_region
      _
    $region13: #{tpu_custom_call.1} parent=1 // pred_fallthru
      _
    // Predicated region
    $region14: #{tpu_custom_call.1} parent=1 // pred_check
      _
    $region15: #{tpu_custom_call.1} parent=1 // pred_check_branch
      %29 = sbr.rel (0) target = $region17
    $region16: #{tpu_custom_call.1} parent=1 // pred_region
      _
    $region17: #{tpu_custom_call.1} parent=1 // pred_fallthru
      _
    // Predicated region
    $region18: #{tpu_custom_call.1} parent=1 // pred_check
      _
    $region19: #{tpu_custom_call.1} parent=1 // pred_check_branch
      %31 = sbr.rel (0) target = $region21
    $region20: #{tpu_custom_call.1} parent=1 // pred_region
      _
    $region21: #{tpu_custom_call.1} parent=1 // pred_fallthru
      _
    // Predicated region
    $region22: #{tpu_custom_call.1} parent=1 // pred_check
      _
    $region23: #{tpu_custom_call.1} parent=1 // pred_check_branch
      %33 = sbr.rel (0) target = $region25
    $region24: #{tpu_custom_call.1} parent=1 // pred_region
      _
    $region25: #{tpu_custom_call.1} parent=1 // pred_fallthru
      _
    // Predicated region
    $region26: #{tpu_custom_call.1} parent=1 // pred_check
      _
    $region27: #{tpu_custom_call.1} parent=1 // pred_check_branch
      %35 = sbr.rel (0) target = $region29
    $region28: #{tpu_custom_call.1} parent=1 // pred_region
      _
    $region29: #{tpu_custom_call.1} parent=1 // pred_fallthru
      _
    // Predicated region
    $region30: #{tpu_custom_call.1} parent=1 // pred_check
      _
    $region31: #{tpu_custom_call.1} parent=1 // pred_check_branch
      %37 = sbr.rel (0) target = $region33
    $region32: #{tpu_custom_call.1} parent=1 // pred_region
      %38 = dma.done [#allocation3], 128
    $region33: #{tpu_custom_call.1} parent=1 // pred_fallthru
      _
    %v39 = vld [vmem:[#allocation2] sm:$0xff]
    %v40 = vld [vmem:[%s1] sm:$0xff]
    %v41 = vld [vmem:[%s1 + $0x8] sm:$0x3]
    %v42 = vld [vmem:[%s2] sm:$0x1]
    %v44 = vlaneseq
    %v45 = vshrl.u32 %v44, 7
    %v46 = vsub.s32 0, %v45
    %v47 = vrot.slane %v42, %v46
    %vm49 = vcmask 80896
    %v51 = vsel %vm49, %v39, 0
    %vm53 = vcmask 1041408
    %v55 = vsel %vm53, %v41, 0
    %57 = vmatprep.subr.mxu0 0.0
    %58 = vmatpush1.msra.mxu0 %v40
    %59 = vmatprep.subr.mxu0 0.0
    %60 = vmatpush1.msra.mxu0 %v55
    %61 = vmatprep.subr.mxu0 0.0
    %62 = vmatpush1.msra.mxu0 0.0
    %63 = vmatprep.subr.mxu0 0.0
    %64 = vmatpush1.msra.mxu0 0.0
    %65 = vmatprep.subr.mxu0 0.0
    %66 = vmatpush1.msra.mxu0 0.0
    %67 = vmatprep.subr.mxu0 0.0
    %68 = vmatpush1.msra.mxu0 0.0
    %69 = vmatprep.subr.mxu0 0.0
    %70 = vmatpush1.msra.mxu0 0.0
    %71 = vmatprep.subr.mxu0 0.0
    %72 = vmatpush1.msra.mxu0 0.0
    %73 = vmatprep.subr.mxu0 0.0
    %74 = vmatpush1.msra.mxu0 0.0
    %75 = vmatprep.subr.mxu0 0.0
    %76 = vmatpush1.msra.mxu0 0.0
    %77 = vmatprep.subr.mxu0 0.0
    %78 = vmatpush1.msra.mxu0 0.0
    %79 = vmatprep.subr.mxu0 0.0
    %80 = vmatpush1.msra.mxu0 0.0
    %81 = vmatprep.subr.mxu0 0.0
    %82 = vmatpush1.msra.mxu0 0.0
    %83 = vmatprep.subr.mxu0 0.0
    %84 = vmatpush1.msra.mxu0 0.0
    %85 = vmatprep.subr.mxu0 0.0
    %86 = vmatpush1.msra.mxu0 0.0
    %87 = vmatprep.subr.mxu0 0.0
    %88 = vmatpush1.msra.mxu0 0.0
    %89 = vmatprep.subr.mxu0 0.0
    %90 = vmatpush1.msra.mxu0 0.0
    %91 = vmatprep.subr.mxu0 0.0
    %92 = vmatpush1.msra.mxu0 0.0
    %93 = vmatprep.subr.mxu0 0.0
    %94 = vmatpush1.msra.mxu0 0.0
    %95 = vmatprep.subr.mxu0 0.0
    %96 = vmatpush1.msra.mxu0 0.0
    %97 = vmatprep.subr.mxu0 0.0
    %98 = vmatpush1.msra.mxu0 0.0
    %99 = vmatprep.subr.mxu0 0.0
    %100 = vmatpush1.msra.mxu0 0.0
    %101 = vmatprep.subr.mxu0 0.0
    %102 = vmatpush1.msra.mxu0 0.0
    %103 = vmatprep.subr.mxu0 0.0
    %104 = vmatpush1.msra.mxu0 0.0
    %105 = vmatprep.subr.mxu0 0.0
    %106 = vmatpush1.msra.mxu0 0.0
    %107 = vmatprep.subr.mxu0 0.0
    %108 = vmatpush1.msra.mxu0 0.0
    %109 = vmatprep.subr.mxu0 0.0
    %110 = vmatpush1.msra.mxu0 0.0
    %111 = vmatprep.subr.mxu0 0.0
    %112 = vmatpush1.msra.mxu0 0.0
    %113 = vmatprep.subr.mxu0 0.0
    %114 = vmatpush1.msra.mxu0 0.0
    %115 = vmatprep.subr.mxu0 0.0
    %116 = vmatpush1.msra.mxu0 0.0
    %117 = vmatprep.subr.mxu0 0.0
    %118 = vmatpush1.msra.mxu0 0.0
    %119 = vmatprep.subr.mxu0 0.0
    %120 = vmatpush1.msra.mxu0 0.0
    %121 = vmatprep.mubr.f32.mxu0 0.0
    %122 = vmatmul.mubr.f32.gmra.mrb[0].mxu0 %v51
    %v123 = vpop.f32.mrb[0].mxu0
    %v124 = vadd.f32 %v47, %v123
    %v125 = vpop.f32.mrb[0].mxu0
    %126 = vdwg.mxu0
    %v127 = vmax.f32 %v124, 0.0
    %v128 = vld [vmem:[%s3] sm:$0xff]
    %v129 = vld [vmem:[%s3 + $0x8] sm:$0xff]
    %v130 = vld [vmem:[%s3 + $0x10] sm:$0xff]
    %v131 = vld [vmem:[%s3 + $0x18] sm:$0xff]
    %v132 = vld [vmem:[%s3 + $0x20] sm:$0xff]
    %v133 = vld [vmem:[%s3 + $0x28] sm:$0xff]
    %v134 = vld [vmem:[%s3 + $0x30] sm:$0xff]
    %v135 = vld [vmem:[%s3 + $0x38] sm:$0xff]
    %v136 = vld [vmem:[%s4] sm:$0x1]
    %v138 = vlaneseq
    %v139 = vshrl.u32 %v138, 7
    %v140 = vsub.s32 0, %v139
    %v141 = vrot.slane %v136, %v140
    %vm143 = vcmask 523264
    %v145 = vsel %vm143, %v127, 0
    %147 = vmatprep.subr.mxu0 0.0
    %148 = vmatpush1.msra.mxu0 %v128
    %149 = vmatprep.subr.mxu0 0.0
    %150 = vmatpush1.msra.mxu0 %v129
    %151 = vmatprep.subr.mxu0 0.0
    %152 = vmatpush1.msra.mxu0 %v130
    %153 = vmatprep.subr.mxu0 0.0
    %154 = vmatpush1.msra.mxu0 %v131
    %155 = vmatprep.subr.mxu0 0.0
    %156 = vmatpush1.msra.mxu0 %v132
    %157 = vmatprep.subr.mxu0 0.0
    %158 = vmatpush1.msra.mxu0 %v133
    %159 = vmatprep.subr.mxu0 0.0
    %160 = vmatpush1.msra.mxu0 %v134
    %161 = vmatprep.subr.mxu0 0.0
    %162 = vmatpush1.msra.mxu0 %v135
    %163 = vmatprep.subr.mxu0 0.0
    %164 = vmatpush1.msra.mxu0 0.0
    %165 = vmatprep.subr.mxu0 0.0
    %166 = vmatpush1.msra.mxu0 0.0
    %167 = vmatprep.subr.mxu0 0.0
    %168 = vmatpush1.msra.mxu0 0.0
    %169 = vmatprep.subr.mxu0 0.0
    %170 = vmatpush1.msra.mxu0 0.0
    %171 = vmatprep.subr.mxu0 0.0
    %172 = vmatpush1.msra.mxu0 0.0
    %173 = vmatprep.subr.mxu0 0.0
    %174 = vmatpush1.msra.mxu0 0.0
    %175 = vmatprep.subr.mxu0 0.0
    %176 = vmatpush1.msra.mxu0 0.0
    %177 = vmatprep.subr.mxu0 0.0
    %178 = vmatpush1.msra.mxu0 0.0
    %179 = vmatprep.subr.mxu0 0.0
    %180 = vmatpush1.msra.mxu0 0.0
    %181 = vmatprep.subr.mxu0 0.0
    %182 = vmatpush1.msra.mxu0 0.0
    %183 = vmatprep.subr.mxu0 0.0
    %184 = vmatpush1.msra.mxu0 0.0
    %185 = vmatprep.subr.mxu0 0.0
    %186 = vmatpush1.msra.mxu0 0.0
    %187 = vmatprep.subr.mxu0 0.0
    %188 = vmatpush1.msra.mxu0 0.0
    %189 = vmatprep.subr.mxu0 0.0
    %190 = vmatpush1.msra.mxu0 0.0
    %191 = vmatprep.subr.mxu0 0.0
    %192 = vmatpush1.msra.mxu0 0.0
    %193 = vmatprep.subr.mxu0 0.0
    %194 = vmatpush1.msra.mxu0 0.0
    %195 = vmatprep.subr.mxu0 0.0
    %196 = vmatpush1.msra.mxu0 0.0
    %197 = vmatprep.subr.mxu0 0.0
    %198 = vmatpush1.msra.mxu0 0.0
    %199 = vmatprep.subr.mxu0 0.0
    %200 = vmatpush1.msra.mxu0 0.0
    %201 = vmatprep.subr.mxu0 0.0
    %202 = vmatpush1.msra.mxu0 0.0
    %203 = vmatprep.subr.mxu0 0.0
    %204 = vmatpush1.msra.mxu0 0.0
    %205 = vmatprep.subr.mxu0 0.0
    %206 = vmatpush1.msra.mxu0 0.0
    %207 = vmatprep.subr.mxu0 0.0
    %208 = vmatpush1.msra.mxu0 0.0
    %209 = vmatprep.subr.mxu0 0.0
    %210 = vmatpush1.msra.mxu0 0.0
    %211 = vmatprep.mubr.f32.mxu0 0.0
    %212 = vmatmul.mubr.f32.gmra.mrb[0].mxu0 %v145
    %v213 = vpop.f32.mrb[0].mxu0
    %v214 = vadd.f32 %v141, %v213
    %v215 = vpop.f32.mrb[0].mxu0
    %216 = vdwg.mxu0
    %v217 = vmax.f32 %v214, 0.0
    %v218 = vld [vmem:[%s5] sm:$0xff]
    %v219 = vld [vmem:[%s5 + $0x8] sm:$0xff]
    %v220 = vld [vmem:[%s5 + $0x10] sm:$0xff]
    %v221 = vld [vmem:[%s5 + $0x18] sm:$0xff]
    %v222 = vld [vmem:[%s5 + $0x20] sm:$0xff]
    %v223 = vld [vmem:[%s5 + $0x28] sm:$0xff]
    %v224 = vld [vmem:[%s5 + $0x30] sm:$0xff]
    %v225 = vld [vmem:[%s5 + $0x38] sm:$0xff]
    %v226 = vld [vmem:[%s6] sm:$0x1]
    %v228 = vlaneseq
    %v229 = vshrl.u32 %v228, 7
    %v230 = vsub.s32 0, %v229
    %v231 = vrot.slane %v226, %v230
    %v234 = vsel %vm143, %v217, 0
    %236 = vmatprep.subr.mxu0 0.0
    %237 = vmatpush1.msra.mxu0 %v218
    %238 = vmatprep.subr.mxu0 0.0
    %239 = vmatpush1.msra.mxu0 %v219
    %240 = vmatprep.subr.mxu0 0.0
    %241 = vmatpush1.msra.mxu0 %v220
    %242 = vmatprep.subr.mxu0 0.0
    %243 = vmatpush1.msra.mxu0 %v221
    %244 = vmatprep.subr.mxu0 0.0
    %245 = vmatpush1.msra.mxu0 %v222
    %246 = vmatprep.subr.mxu0 0.0
    %247 = vmatpush1.msra.mxu0 %v223
    %248 = vmatprep.subr.mxu0 0.0
    %249 = vmatpush1.msra.mxu0 %v224
    %250 = vmatprep.subr.mxu0 0.0
    %251 = vmatpush1.msra.mxu0 %v225
    %252 = vmatprep.subr.mxu0 0.0
    %253 = vmatpush1.msra.mxu0 0.0
    %254 = vmatprep.subr.mxu0 0.0
    %255 = vmatpush1.msra.mxu0 0.0
    %256 = vmatprep.subr.mxu0 0.0
    %257 = vmatpush1.msra.mxu0 0.0
    %258 = vmatprep.subr.mxu0 0.0
    %259 = vmatpush1.msra.mxu0 0.0
    %260 = vmatprep.subr.mxu0 0.0
    %261 = vmatpush1.msra.mxu0 0.0
    %262 = vmatprep.subr.mxu0 0.0
    %263 = vmatpush1.msra.mxu0 0.0
    %264 = vmatprep.subr.mxu0 0.0
    %265 = vmatpush1.msra.mxu0 0.0
    %266 = vmatprep.subr.mxu0 0.0
    %267 = vmatpush1.msra.mxu0 0.0
    %268 = vmatprep.subr.mxu0 0.0
    %269 = vmatpush1.msra.mxu0 0.0
    %270 = vmatprep.subr.mxu0 0.0
    %271 = vmatpush1.msra.mxu0 0.0
    %272 = vmatprep.subr.mxu0 0.0
    %273 = vmatpush1.msra.mxu0 0.0
    %274 = vmatprep.subr.mxu0 0.0
    %275 = vmatpush1.msra.mxu0 0.0
    %276 = vmatprep.subr.mxu0 0.0
    %277 = vmatpush1.msra.mxu0 0.0
    %278 = vmatprep.subr.mxu0 0.0
    %279 = vmatpush1.msra.mxu0 0.0
    %280 = vmatprep.subr.mxu0 0.0
    %281 = vmatpush1.msra.mxu0 0.0
    %282 = vmatprep.subr.mxu0 0.0
    %283 = vmatpush1.msra.mxu0 0.0
    %284 = vmatprep.subr.mxu0 0.0
    %285 = vmatpush1.msra.mxu0 0.0
    %286 = vmatprep.subr.mxu0 0.0
    %287 = vmatpush1.msra.mxu0 0.0
    %288 = vmatprep.subr.mxu0 0.0
    %289 = vmatpush1.msra.mxu0 0.0
    %290 = vmatprep.subr.mxu0 0.0
    %291 = vmatpush1.msra.mxu0 0.0
    %292 = vmatprep.subr.mxu0 0.0
    %293 = vmatpush1.msra.mxu0 0.0
    %294 = vmatprep.subr.mxu0 0.0
    %295 = vmatpush1.msra.mxu0 0.0
    %296 = vmatprep.subr.mxu0 0.0
    %297 = vmatpush1.msra.mxu0 0.0
    %298 = vmatprep.subr.mxu0 0.0
    %299 = vmatpush1.msra.mxu0 0.0
    %300 = vmatprep.mubr.f32.mxu0 0.0
    %301 = vmatmul.mubr.f32.gmra.mrb[0].mxu0 %v234
    %v302 = vpop.f32.mrb[0].mxu0
    %v303 = vadd.f32 %v231, %v302
    %v304 = vpop.f32.mrb[0].mxu0
    %305 = vdwg.mxu0
    %vm306 = vcmask 48128
    %307 = vst.msk [vmem:[#allocation5] sm:$0xff] %vm306, %v303
    // Predicated region
    $region34: #{tpu_custom_call.1} parent=1 // pred_check
      _
    $region35: #{tpu_custom_call.1} parent=1 // pred_check_branch
      %309 = sbr.rel (0) target = $region37
    $region36: #{tpu_custom_call.1} parent=1 // pred_region
      %s311 = ssub.s32 128, 128
      %312 = vsyncadd [#allocation4], %s311
      %s314 = sshll.u32 [#allocation5], 4
      %s315 = int_to_ptr.vmem [resolvable:$true] %s314
      %317 = dma.vmem_to_hbm [thread:$0]  %s315, 128, %s7, [#allocation4]
    $region37: #{tpu_custom_call.1} parent=1 // pred_fallthru
      _
    // Predicated region
    $region38: #{tpu_custom_call.1} parent=1 // pred_check
      _
    $region39: #{tpu_custom_call.1} parent=1 // pred_check_branch
      %319 = sbr.rel (0) target = $region41
    $region40: #{tpu_custom_call.1} parent=1 // pred_region
      %320 = dma.done [#allocation4], 128
    $region41: #{tpu_custom_call.1} parent=1 // pred_fallthru
      _
    %321 = vsyncpa [#allocation3], 1
    %322 = vsyncpa [#allocation4], 1

</llo_original>
